<compile_context>
chip_gen: v6e
topology: v6e:2x2x1
jax: 0.10.0
libtpu: 0.0.40
codegen_flags: <defaults>
</compile_context>

<pallas_src>
import jax
import jax.numpy as jnp
from jax.experimental import pallas as pl
from jax.experimental.pallas import tpu as pltpu


def highlight_kernel(x_ref, w_ref, b_ref, mask_ref, out_ref):
    # x_ref:    (1, R, D) VMEM (streamed)
    # w_ref:    (1, D)    VMEM (resident across the grid)
    # b_ref:    (1, 1)    SMEM scalar
    # mask_ref: (1, R)    VMEM (streamed)
    # out_ref:  (1, R)    VMEM
    x = x_ref[...].astype(jnp.float32)                  # (1, R, D)
    w = w_ref[...].astype(jnp.float32)[:, None, :]      # (1, 1, D)
    b = b_ref[0, 0]

    # 1x1 conv (D -> 1): VPU multiply + lane reduction -> lane-dense (1, R) logits.
    logits = jnp.sum(x * w, axis=-1) + b                # (1, R)

    # Exact mask_logits semantics: additive -1e30 mask, then sigmoid (EUP).
    mask = mask_ref[...].astype(jnp.float32)            # (1, R)
    logits = logits + (1.0 - mask) * jnp.float32(-1e30)
    out_ref[...] = jax.nn.sigmoid(logits)


def _pick_row_tile(n_rows, d, target_bytes=2 * 1024 * 1024):
    """Row-tile targeting ~2 MiB x-blocks; multiple of 128 (lane-dense out) or full."""
    r = target_bytes // (4 * d)
    r = max(128, min(8192, int(r)))
    r = (r // 128) * 128
    if n_rows <= r:
        return n_rows          # single full-array block (full-dim layout rule applies)
    return r


def highlight_layer_forward(x, weight, bias, mask, *, row_tile=None):
    """x: (B, T, D), weight: (D, 1), bias: (1, 1) or (1,), mask: (B, T).

    Returns (B, T) f32 scores in [0, 1)."""
    B, T, D = x.shape
    BT = B * T

    # Free, contiguous reshapes: fold batch into the row axis.
    x3d = x.reshape(1, BT, D)
    mask2d = mask.reshape(1, BT)
    w_row = weight.reshape(1, D).astype(jnp.float32)
    b = jnp.asarray(bias, jnp.float32).reshape(1, 1)

    if row_tile is None:
        row_tile = _pick_row_tile(BT, D)
    row_tile = min(row_tile, BT)
    grid = (pl.cdiv(BT, row_tile),)

    # VMEM budget: double-buffered x tile + mask/out tiles + resident weight, headroom x2.
    x_blk = row_tile * D * 4
    vec_blk = row_tile * 4
    needed = 2 * x_blk + 4 * vec_blk + D * 4
    vmem_limit = max(16 * 1024 * 1024,
                     min(2 * needed + (1 << 20), 48 * 1024 * 1024))

    out = pl.pallas_call(
        highlight_kernel,
        out_shape=jax.ShapeDtypeStruct((1, BT), jnp.float32),
        grid=grid,
        in_specs=[
            pl.BlockSpec((1, row_tile, D), lambda i: (0, i, 0)),     # x (streamed)
            pl.BlockSpec((1, D), lambda i: (0, 0)),                  # weight (resident)
            pl.BlockSpec(memory_space=pltpu.MemorySpace.SMEM),       # bias scalar
            pl.BlockSpec((1, row_tile), lambda i: (0, i)),           # mask (streamed)
        ],
        out_specs=pl.BlockSpec((1, row_tile), lambda i: (0, i)),
        compiler_params=pltpu.CompilerParams(
            dimension_semantics=("parallel",),
            vmem_limit_bytes=int(vmem_limit),
        ),
    )(x3d, w_row, b, mask2d)
    return out.reshape(B, T)


if __name__ == "__main__":
    def reference(x, weight, bias, mask):
        logits = jnp.einsum('btd,do->bt', x, weight,
                            precision=jax.lax.Precision.HIGHEST) + bias.reshape(())[()]
        logits = logits + (1.0 - mask) * (-1e30)
        return jax.nn.sigmoid(logits)

    key = jax.random.PRNGKey(0)
    k1, k2, k3 = jax.random.split(key, 3)

    # --- small test (shapes implied by the module: batch=2, seq=8, dim=32) ---
    B, T, D = 2, 8, 32
    kx, kw, kb = jax.random.split(k1, 3)
    x = jax.random.normal(kx, (B, T, D), dtype=jnp.float32)
    lengths = jnp.array([T, 5], dtype=jnp.int32)
    mask = (jnp.arange(T)[None, :] < lengths[:, None]).astype(jnp.float32)
    bound = 1.0 / (D ** 0.5)
    weight = jax.random.uniform(kw, (D, 1), jnp.float32, -bound, bound)
    bias = jax.random.uniform(kb, (1, 1), jnp.float32, -bound, bound)

    scores = jax.block_until_ready(highlight_layer_forward(x, weight, bias, mask))
    ref = reference(x, weight, bias, mask)
    assert scores.shape == (B, T)
    assert jnp.allclose(scores, ref, atol=1e-5, rtol=1e-5)

    # --- medium test: forces a multi-step pipelined grid (row_tile=512, 4 steps) ---
    B2, T2, D2 = 2, 1024, 64
    kx2, kw2, kb2 = jax.random.split(k2, 3)
    x2 = jax.random.normal(kx2, (B2, T2, D2), dtype=jnp.float32)
    lengths2 = jnp.array([T2, 700], dtype=jnp.int32)
    mask2 = (jnp.arange(T2)[None, :] < lengths2[:, None]).astype(jnp.float32)
    bound2 = 1.0 / (D2 ** 0.5)
    weight2 = jax.random.uniform(kw2, (D2, 1), jnp.float32, -bound2, bound2)
    bias2 = jax.random.uniform(kb2, (1, 1), jnp.float32, -bound2, bound2)

    scores2 = jax.block_until_ready(
        highlight_layer_forward(x2, weight2, bias2, mask2, row_tile=512))
    ref2 = reference(x2, weight2, bias2, mask2)
    assert scores2.shape == (B2, T2)
    assert jnp.allclose(scores2, ref2, atol=1e-5, rtol=1e-5)

    # --- ragged test: B*T = 999 not a multiple of the 128-row tile (padded last block) ---
    B3, T3, D3 = 3, 333, 48
    kx3, kw3, kb3 = jax.random.split(k3, 3)
    x3 = jax.random.normal(kx3, (B3, T3, D3), dtype=jnp.float32)
    lengths3 = jnp.array([T3, 200, 17], dtype=jnp.int32)
    mask3 = (jnp.arange(T3)[None, :] < lengths3[:, None]).astype(jnp.float32)
    bound3 = 1.0 / (D3 ** 0.5)
    weight3 = jax.random.uniform(kw3, (D3, 1), jnp.float32, -bound3, bound3)
    bias3 = jax.random.uniform(kb3, (1, 1), jnp.float32, -bound3, bound3)

    scores3 = jax.block_until_ready(
        highlight_layer_forward(x3, weight3, bias3, mask3, row_tile=128))
    ref3 = reference(x3, weight3, bias3, mask3)
    assert scores3.shape == (B3, T3)
    assert jnp.allclose(scores3, ref3, atol=1e-5, rtol=1e-5)

    # TODO(synk): HighLightLayer.compute_loss (training-time weighted BCE) is not part of
    # the forward pass and is left to plain JAX outside the kernel.
    print("KERNEL_OK")
</pallas_src>

<mosaic_0001>
module attributes {stable_mosaic.version = 11 : i64} {
  func.func @highlight_kernel(%arg0: i32, %arg1: memref<1x16x32xf32, #tpu.memory_space<vmem>>, %arg2: memref<1x32xf32, #tpu.memory_space<vmem>>, %arg3: memref<1x1xf32, #tpu.memory_space<smem>>, %arg4: memref<1x16xf32, #tpu.memory_space<vmem>>, %arg5: memref<1x16xf32, #tpu.memory_space<vmem>>) attributes {dimension_semantics = [#tpu.dimension_semantics<parallel>], iteration_bounds = array<i64: 1>, scalar_prefetch = 0 : i64, scratch_operands = 0 : i64, tpu.core_type = #tpu.core_type<tc>, window_params = [{transform_indices = @transform_0, window_bounds = array<i64: 1, 16, 32>}, {pipeline_mode = #tpu.pipeline_mode<synchronous>, transform_indices = @transform_1, window_bounds = array<i64: 1, 32>}, {transform_indices = @transform_2, window_bounds = array<i64: 1, 1>}, {transform_indices = @transform_3, window_bounds = array<i64: 1, 16>}, {transform_indices = @transform_4, window_bounds = array<i64: 1, 16>}]} {
    %c0 = arith.constant 0 : index
    %c0_0 = arith.constant 0 : index
    %c0_1 = arith.constant 0 : index
    %0 = vector.load %arg1[%c0, %c0_0, %c0_1] : memref<1x16x32xf32, #tpu.memory_space<vmem>>, vector<1x16x32xf32>
    %c0_2 = arith.constant 0 : index
    %c0_3 = arith.constant 0 : index
    %1 = vector.load %arg2[%c0_2, %c0_3] : memref<1x32xf32, #tpu.memory_space<vmem>>, vector<1x32xf32>
    %2 = vector.shape_cast %1 : vector<1x32xf32> to vector<1x1x32xf32>
    %c0_4 = arith.constant 0 : index
    %c0_5 = arith.constant 0 : index
    %3 = memref.load %arg3[%c0_4, %c0_5] : memref<1x1xf32, #tpu.memory_space<smem>>
    %4 = vector.broadcast %2 : vector<1x1x32xf32> to vector<1x16x32xf32>
    %5 = arith.mulf %0, %4 : vector<1x16x32xf32>
    %cst = arith.constant dense<0.000000e+00> : vector<1x16xf32>
    %6 = vector.multi_reduction <add>, %5, %cst [2] : vector<1x16x32xf32> to vector<1x16xf32>
    %7 = vector.broadcast %3 : f32 to vector<1x16xf32>
    %8 = arith.addf %6, %7 : vector<1x16xf32>
    %c0_6 = arith.constant 0 : index
    %c0_7 = arith.constant 0 : index
    %9 = vector.load %arg4[%c0_6, %c0_7] : memref<1x16xf32, #tpu.memory_space<vmem>>, vector<1x16xf32>
    %cst_8 = arith.constant 1.000000e+00 : f32
    %10 = vector.broadcast %cst_8 : f32 to vector<1x16xf32>
    %11 = arith.subf %10, %9 : vector<1x16xf32>
    %cst_9 = arith.constant -1.000000e+30 : f32
    %12 = vector.broadcast %cst_9 : f32 to vector<1x16xf32>
    %13 = arith.mulf %11, %12 : vector<1x16xf32>
    %14 = arith.addf %8, %13 : vector<1x16xf32>
    %15 = arith.negf %14 : vector<1x16xf32>
    %16 = math.exp %15 : vector<1x16xf32>
    %cst_10 = arith.constant 1.000000e+00 : f32
    %17 = vector.broadcast %cst_10 : f32 to vector<1x16xf32>
    %18 = arith.addf %17, %16 : vector<1x16xf32>
    %19 = arith.divf %17, %18 : vector<1x16xf32>
    %c0_11 = arith.constant 0 : index
    %c0_12 = arith.constant 0 : index
    %20 = vector.load %arg5[%c0_11, %c0_12] : memref<1x16xf32, #tpu.memory_space<vmem>>, vector<1x16xf32>
    tpu.vector_store %arg5[%c0_11, %c0_12], %19 {strides = array<i32>} : memref<1x16xf32, #tpu.memory_space<vmem>>, vector<1x16xf32>,
    return
  }
  func.func @transform_0(%arg0: i32) -> (i32, i32, i32) {
    %c0_i32 = arith.constant 0 : i32
    %c0_i32_0 = arith.constant 0 : i32
    %c0_i32_1 = arith.constant 0 : i32
    return %c0_i32, %arg0, %c0_i32_0 : i32, i32, i32
  }
  func.func @transform_1(%arg0: i32) -> (i32, i32) {
    %c0_i32 = arith.constant 0 : i32
    %c0_i32_0 = arith.constant 0 : i32
    %c0_i32_1 = arith.constant 0 : i32
    return %c0_i32, %c0_i32_0 : i32, i32
  }
  func.func @transform_2(%arg0: i32) -> (i32, i32) {
    %c0_i32 = arith.constant 0 : i32
    %c0_i32_0 = arith.constant 0 : i32
    %c0_i32_1 = arith.constant 0 : i32
    return %c0_i32, %c0_i32_0 : i32, i32
  }
  func.func @transform_3(%arg0: i32) -> (i32, i32) {
    %c0_i32 = arith.constant 0 : i32
    %c0_i32_0 = arith.constant 0 : i32
    return %c0_i32, %arg0 : i32, i32
  }
  func.func @transform_4(%arg0: i32) -> (i32, i32) {
    %c0_i32 = arith.constant 0 : i32
    %c0_i32_0 = arith.constant 0 : i32
    return %c0_i32, %arg0 : i32, i32
  }
}

</mosaic_0001>

<llo_original>
// kernel: tpu_custom_call.1
$region0: #{tpu_custom_call.1}
  #allocation0 [shape = 'u32[]', space=smem, size = 0x4, offset = 0x4, fixed_abs, tag = 'smem constant byte address 0x4 - core index']
  #allocation1 [shape = 'u32[144,128]{1,0:T(1,128)}', space=vmem, size = 0x12000, scoped, tag = 'internal scratch']
  #allocation2 [shape = 'f32[1,1]{1,0:T(1,128)S(6)}', space=smem, size = 0x200, scoped, tag = 'scoped memory for tpu_custom_call.1']
  %s0 = inlined_call_operand.hbm [shape: f32[1,16,32], index: 0, kind: input, shape index: {}]
  %s1 = inlined_call_operand.vmem [shape: f32[1,32], index: 1, kind: input, shape index: {}]
  %s2 = inlined_call_operand.<no memory space> [shape: f32[1,1], index: 2, kind: input, shape index: {}]
  %s3 = inlined_call_operand.vmem [shape: f32[1,16], index: 3, kind: input, shape index: {}]
  %s4 = inlined_call_operand.hbm [shape: f32[1,16], index: 4, kind: output, shape index: {}]
  %s5 = sld [smem:[#allocation0]]
  $region30: #{tpu_custom_call.1} parent=0
    _
  %s7 = ssub.s32 1, %s5
  %s8 = scalar_select 0, %s7, %s5
  %9 = sst [smem:[#allocation2]] %s2
  $region1: #{tpu_custom_call.1} parent=0
    #allocation3 [shape = 'u8[8192]{0}', space=vmem, size = 0x2000, scoped, tag = 'input window, operand 0, single buffered']
    #allocation4 [shape = 's32[1]{0}', space=sflag, size = 0x4, scoped, tag = 'scoped memory for tpu_custom_call.1']
    #allocation5 [shape = 's32[1]{0}', space=sflag, size = 0x4, scoped, tag = 'scoped memory for tpu_custom_call.1']
    #allocation6 [shape = 'u8[512]{0}', space=vmem, size = 0x400, scoped, tag = 'output window, operand 0, single buffered']
    %10 = vsyncpa [#allocation4], 0
    %11 = vsyncpa [#allocation5], 0
    // Predicated region
    $region2: #{tpu_custom_call.1} parent=1 // pred_check
      _
    $region3: #{tpu_custom_call.1} parent=1 // pred_check_branch
      %13 = sbr.rel (0) target = $region5
    $region4: #{tpu_custom_call.1} parent=1 // pred_region
      %s15 = ssub.s32 256, 256
      %16 = vsyncadd [#allocation4], %s15
      %s17 = sshll.u32 [#allocation3], 4
      %s18 = int_to_ptr.vmem [resolvable:$true] %s17
      %23 = dma.hbm_to_vmem [thread:$0]  %s0, 256, %s18, [#allocation4], 128, 128, 8
    $region5: #{tpu_custom_call.1} parent=1 // pred_fallthru
      _
    // Predicated region
    $region6: #{tpu_custom_call.1} parent=1 // pred_check
      _
    $region7: #{tpu_custom_call.1} parent=1 // pred_check_branch
      %25 = sbr.rel (0) target = $region9
    $region8: #{tpu_custom_call.1} parent=1 // pred_region
      _
    $region9: #{tpu_custom_call.1} parent=1 // pred_fallthru
      _
    // Predicated region
    $region10: #{tpu_custom_call.1} parent=1 // pred_check
      _
    $region11: #{tpu_custom_call.1} parent=1 // pred_check_branch
      %27 = sbr.rel (0) target = $region13
    $region12: #{tpu_custom_call.1} parent=1 // pred_region
      _
    $region13: #{tpu_custom_call.1} parent=1 // pred_fallthru
      _
    // Predicated region
    $region14: #{tpu_custom_call.1} parent=1 // pred_check
      _
    $region15: #{tpu_custom_call.1} parent=1 // pred_check_branch
      %29 = sbr.rel (0) target = $region17
    $region16: #{tpu_custom_call.1} parent=1 // pred_region
      _
    $region17: #{tpu_custom_call.1} parent=1 // pred_fallthru
      _
    // Predicated region
    $region18: #{tpu_custom_call.1} parent=1 // pred_check
      _
    $region19: #{tpu_custom_call.1} parent=1 // pred_check_branch
      %31 = sbr.rel (0) target = $region21
    $region20: #{tpu_custom_call.1} parent=1 // pred_region
      %32 = dma.done [#allocation4], 256
    $region21: #{tpu_custom_call.1} parent=1 // pred_fallthru
      _
    %v33 = vld [vmem:[#allocation3] sm:$0xff]
    %v34 = vld [vmem:[#allocation3 + $0x8] sm:$0xff]
    %v35 = vld [vmem:[%s1] sm:$0x1]
    %s36 = sld [smem:[#allocation2]]
    %v38 = vlaneseq
    %v39 = vshrl.u32 %v38, 7
    %v40 = vsub.s32 0, %v39
    %v41 = vrot.slane %v35, %v40
    %v43 = vmul.f32 %v33, %v41
    %v44 = vmul.f32 %v34, %v41
    %vm45 = vcmask 261120
    %v46 = vsel %vm45, %v43, 0.0
    %47 = vadd.xlane.f32.xlu0 %v46
    %v48 = vpop.xlane.xlu0 %47
    %v49 = vsel %vm45, %v44, 0.0
    %50 = vadd.xlane.f32.xlu0 %v49
    %v51 = vpop.xlane.xlu0 %50
    %v52 = vstv %s36
    %v53 = vadd.f32 %v48, %v52
    %v54 = vadd.f32 %v51, %v52
    %v55 = vld [vmem:[%s3] sm:$0x1]
    %v56 = vsub.f32 1.0, %v55
    %v57 = vmul.f32 %v56, -1e+30
    %v59 = vlaneseq
    %v60 = vshrl.u32 %v59, 7
    %v61 = vsub.s32 0, %v60
    %v62 = vrot.slane %v57, %v61
    %64 = vbcast.lane.b32.xlu0 %v62, 256
    %v65 = vpop.permute.xlu0 %64
    %s67 = sor.u32 256, 8
    %68 = vbcast.lane.b32.xlu0 %v62, %s67
    %v69 = vpop.permute.xlu0 %68
    %v72 = vadd.f32 %v53, %v65
    %v73 = vadd.f32 %v54, %v69
    %v74 = vxor.u32 %v72, 2147483648
    %v75 = vxor.u32 %v73, 2147483648
    %v76 = vmul.f32 %v74, 1.442695
    %v77 = vpow.pop %v76
    %v78 = vmul.f32 %v75, 1.442695
    %v79 = vpow.pop %v78
    %v80 = vadd.f32 %v77, 1.0
    %v81 = vadd.f32 %v79, 1.0
    %v82 = vrcp.pop %v80
    %v83 = vmul.f32 1.0, %v82
    %v84 = vrcp.pop %v81
    %v85 = vmul.f32 1.0, %v84
    %88 = vset.pattern.permute.xlu0 0
    %89 = vperm.xlu0 %88, %v83
    %v90 = vpop.permute.xlu0 %89
    %91 = vset.pattern.permute.xlu0 0
    %92 = vperm.xlu0 %91, %v85
    %v93 = vpop.permute.xlu0 %92
    %v94 = vlaneseq
    %v95 = vand.u32 %v94, 127
    %v96 = vlaneseq
    %v97 = vshrl.u32 %v96, 7
    %v98 = vsub.s32 %v95, %v97
    %v99 = vrot.slane %v90, %v98
    %v100 = vadd.s32 %v95, 4294967288
    %v101 = vlaneseq
    %v102 = vshrl.u32 %v101, 7
    %v103 = vsub.s32 %v100, %v102
    %v104 = vrot.slane %v93, %v103
    %vm105 = vcmask 130112
    %v106 = vsel %vm105, %v104, %v99
    %vm108 = vcmask 122880
    %109 = vst.msk [vmem:[#allocation6] sm:$0x1] %vm108, %v106
    // Predicated region
    $region22: #{tpu_custom_call.1} parent=1 // pred_check
      _
    $region23: #{tpu_custom_call.1} parent=1 // pred_check_branch
      %111 = sbr.rel (0) target = $region25
    $region24: #{tpu_custom_call.1} parent=1 // pred_region
      %s113 = ssub.s32 16, 16
      %114 = vsyncadd [#allocation5], %s113
      %s116 = sshll.u32 [#allocation6], 4
      %s117 = int_to_ptr.vmem [resolvable:$true] %s116
      %119 = dma.vmem_to_hbm [thread:$0]  %s117, 16, %s4, [#allocation5]
    $region25: #{tpu_custom_call.1} parent=1 // pred_fallthru
      _
    // Predicated region
    $region26: #{tpu_custom_call.1} parent=1 // pred_check
      _
    $region27: #{tpu_custom_call.1} parent=1 // pred_check_branch
      %121 = sbr.rel (0) target = $region29
    $region28: #{tpu_custom_call.1} parent=1 // pred_region
      %122 = dma.done [#allocation5], 16
    $region29: #{tpu_custom_call.1} parent=1 // pred_fallthru
      _
    %123 = vsyncpa [#allocation4], 1
    %124 = vsyncpa [#allocation5], 1

</llo_original>
